<compile_context>
chip_gen: v6e
topology: v6e:2x2x1
jax: 0.10.0
libtpu: 0.0.40
codegen_flags: <defaults>
</compile_context>

<pallas_src>
import functools

import jax
import jax.numpy as jnp
from jax.experimental import pallas as pl
from jax.experimental.pallas import tpu as pltpu


def _bn_kernel(x_ref, w_ref, b_ref, o_ref,
               sum_ref, sq_ref, scale_ref, shift_ref, *, eps, inv_count):
    # x_ref / o_ref : (1, TC, THW)   w_ref / b_ref : (TC, 1)
    # scratch       : sum/sq/scale/shift, all (TC, THW) f32
    s = pl.program_id(1)          # 0 = stats sweep, 1 = normalize sweep
    n = pl.program_id(2)
    h = pl.program_id(3)
    first_tile = jnp.logical_and(n == 0, h == 0)

    @pl.when(jnp.logical_and(s == 0, first_tile))
    def _init():
        sum_ref[...] = jnp.zeros_like(sum_ref)
        sq_ref[...] = jnp.zeros_like(sq_ref)

    @pl.when(s == 0)
    def _accumulate():
        x = x_ref[0].astype(jnp.float32)      # (TC, THW)
        sum_ref[...] += x
        sq_ref[...] += x * x

    @pl.when(jnp.logical_and(s == 1, first_tile))
    def _finalize_stats():
        # Per-channel mean / biased variance (training-mode F.batch_norm).
        # sum / sumsq accumulated in f32; var = E[x^2] - E[x]^2, clamped at 0.
        mean = jnp.sum(sum_ref[...], axis=-1, keepdims=True) * inv_count   # (TC,1)
        ex2 = jnp.sum(sq_ref[...], axis=-1, keepdims=True) * inv_count
        var = jnp.maximum(ex2 - mean * mean, 0.0)
        inv_std = jax.lax.rsqrt(var + eps)
        w = w_ref[...].astype(jnp.float32)                                  # (TC,1)
        b = b_ref[...].astype(jnp.float32)
        scale = w * inv_std
        shift = b - mean * scale
        # Pre-broadcast once so the normalize sweep is a pure elementwise
        # multiply-add per tile (no per-iteration broadcast_in_dim).
        scale_ref[...] = jnp.broadcast_to(scale, scale_ref.shape)
        shift_ref[...] = jnp.broadcast_to(shift, shift_ref.shape)

    @pl.when(s == 1)
    def _normalize():
        x = x_ref[0].astype(jnp.float32)
        o_ref[0] = (x * scale_ref[...] + shift_ref[...]).astype(o_ref.dtype)


def _pick_channel_tile(c):
    # Multiple-of-8 sublane tile when possible, otherwise the full channel dim
    # (a full-extent block is always layout-legal).
    if c % 8 == 0:
        for t in (64, 32, 16, 8):
            if c % t == 0:
                return t
    return c


def _pick_spatial_tile(hw, tc, budget_bytes=24 << 20):
    # Lane-dense multiple-of-128 tile that keeps (2x double-buffered input +
    # 2x output blocks + 4 scratch slabs) well inside scoped VMEM on all
    # generations (v7x default scoped limit = 32 MiB).
    for t in (2048, 1024, 512, 256, 128):
        if hw % t == 0 and 10 * tc * t * 4 <= budget_bytes:
            return t
    return hw   # fall back to the full (untiled) spatial dim


def meta_batch_norm2d(x_nchw, weight, bias, *, eps=1e-5):
    """Training-mode BatchNorm2d forward.  x_nchw: (N, C, H, W)."""
    N, C, H, W = x_nchw.shape
    HW = H * W

    # Free reshape (contiguous): spatial axis on lanes, channels on sublanes.
    x3d = x_nchw.reshape(N, C, HW)
    w2d = weight.reshape(C, 1)
    b2d = bias.reshape(C, 1)

    tc = _pick_channel_tile(C)
    thw = _pick_spatial_tile(HW, tc)

    grid = (C // tc, 2, N, HW // thw)   # (channel tiles, sweep, batch, spatial tiles)

    kernel = functools.partial(_bn_kernel, eps=float(eps),
                               inv_count=1.0 / float(N * HW))

    y3d = pl.pallas_call(
        kernel,
        out_shape=jax.ShapeDtypeStruct((N, C, HW), x_nchw.dtype),
        grid_spec=pltpu.PrefetchScalarGridSpec(
            num_scalar_prefetch=0,
            grid=grid,
            in_specs=[
                pl.BlockSpec((1, tc, thw), lambda c, s, n, h: (n, c, h)),
                pl.BlockSpec((tc, 1), lambda c, s, n, h: (c, 0)),
                pl.BlockSpec((tc, 1), lambda c, s, n, h: (c, 0)),
            ],
            # During the stats sweep (s == 0) the output block index is pinned
            # to (0, c, 0), so no garbage write-back happens; the normalize
            # sweep (s == 1) visits and fully writes every block exactly once.
            out_specs=pl.BlockSpec((1, tc, thw),
                                   lambda c, s, n, h: (n * s, c, h * s)),
            scratch_shapes=[
                pltpu.VMEM((tc, thw), jnp.float32),   # per-lane partial sums
                pltpu.VMEM((tc, thw), jnp.float32),   # per-lane partial sum of squares
                pltpu.VMEM((tc, thw), jnp.float32),   # broadcast scale = w * inv_std
                pltpu.VMEM((tc, thw), jnp.float32),   # broadcast shift = b - mean*scale
            ],
        ),
        compiler_params=pltpu.CompilerParams(
            dimension_semantics=("parallel", "arbitrary", "arbitrary", "arbitrary"),
            vmem_limit_bytes=32 * 1024 * 1024,
        ),
    )(x3d, w2d, b2d)

    return y3d.reshape(N, C, H, W)


def _reference(x_nchw, weight, bias, eps=1e-5):
    xf = x_nchw.astype(jnp.float32)
    mean = jnp.mean(xf, axis=(0, 2, 3), keepdims=True)
    var = jnp.mean((xf - mean) ** 2, axis=(0, 2, 3), keepdims=True)
    w = weight.reshape(1, -1, 1, 1)
    b = bias.reshape(1, -1, 1, 1)
    return ((xf - mean) / jnp.sqrt(var + eps) * w + b).astype(x_nchw.dtype)


if __name__ == "__main__":
    key = jax.random.PRNGKey(0)
    kx, kw, kb = jax.random.split(key, 3)

    N, C, H, W = 2, 4, 16, 16
    x = jax.random.normal(kx, (N, C, H, W), dtype=jnp.float32)

    # nn.BatchNorm2d defaults are weight=1, bias=0; perturb deterministically so
    # the affine path is actually exercised.
    weight = jnp.ones((C,), jnp.float32) + 0.1 * jax.random.normal(kw, (C,), jnp.float32)
    bias = jnp.zeros((C,), jnp.float32) + 0.1 * jax.random.normal(kb, (C,), jnp.float32)

    y = meta_batch_norm2d(x, weight, bias, eps=1e-5)
    y = jax.block_until_ready(y)

    y_ref = _reference(x, weight, bias, eps=1e-5)
    assert y.shape == (N, C, H, W)
    assert jnp.allclose(y, y_ref, atol=1e-4, rtol=1e-4), "mismatch vs reference"

    print("KERNEL_OK")
</pallas_src>

<mosaic_0001>
module attributes {stable_mosaic.version = 11 : i64} {
  func.func @_bn_kernel(%arg0: i32, %arg1: i32, %arg2: i32, %arg3: i32, %arg4: memref<1x4x256xf32, #tpu.memory_space<vmem>>, %arg5: memref<4x1xf32, #tpu.memory_space<vmem>>, %arg6: memref<4x1xf32, #tpu.memory_space<vmem>>, %arg7: memref<1x4x256xf32, #tpu.memory_space<vmem>>, %arg8: memref<4x256xf32, #tpu.memory_space<vmem>>, %arg9: memref<4x256xf32, #tpu.memory_space<vmem>>, %arg10: memref<4x256xf32, #tpu.memory_space<vmem>>, %arg11: memref<4x256xf32, #tpu.memory_space<vmem>>) attributes {dimension_semantics = [#tpu.dimension_semantics<parallel>, #tpu.dimension_semantics<arbitrary>, #tpu.dimension_semantics<arbitrary>, #tpu.dimension_semantics<arbitrary>], iteration_bounds = array<i64: 1, 2, 2, 1>, scalar_prefetch = 0 : i64, scratch_operands = 4 : i64, tpu.core_type = #tpu.core_type<tc>, window_params = [{transform_indices = @transform_0, window_bounds = array<i64: 1, 4, 256>}, {transform_indices = @transform_1, window_bounds = array<i64: 4, 1>}, {transform_indices = @transform_2, window_bounds = array<i64: 4, 1>}, {transform_indices = @transform_3, window_bounds = array<i64: 1, 4, 256>}]} {
    %c0_i32 = arith.constant 0 : i32
    %0 = arith.cmpi eq, %arg2, %c0_i32 : i32
    %c0_i32_0 = arith.constant 0 : i32
    %1 = arith.cmpi eq, %arg3, %c0_i32_0 : i32
    %2 = arith.andi %0, %1 : i1
    %c0_i32_1 = arith.constant 0 : i32
    %3 = arith.cmpi eq, %arg1, %c0_i32_1 : i32
    %4 = arith.andi %3, %2 : i1
    %5 = arith.extui %4 : i1 to i32
    %c0_i32_2 = arith.constant 0 : i32
    %6 = arith.cmpi ne, %5, %c0_i32_2 : i32
    scf.if %6 {
      %cst = arith.constant 0.000000e+00 : f32
      %17 = vector.broadcast %cst : f32 to vector<4x256xf32>
      %c0 = arith.constant 0 : index
      %c0_8 = arith.constant 0 : index
      %18 = vector.load %arg8[%c0, %c0_8] : memref<4x256xf32, #tpu.memory_space<vmem>>, vector<4x256xf32>
      tpu.vector_store %arg8[%c0, %c0_8], %17 {strides = array<i32>} : memref<4x256xf32, #tpu.memory_space<vmem>>, vector<4x256xf32>,
      %cst_9 = arith.constant 0.000000e+00 : f32
      %19 = vector.broadcast %cst_9 : f32 to vector<4x256xf32>
      %c0_10 = arith.constant 0 : index
      %c0_11 = arith.constant 0 : index
      %20 = vector.load %arg9[%c0_10, %c0_11] : memref<4x256xf32, #tpu.memory_space<vmem>>, vector<4x256xf32>
      tpu.vector_store %arg9[%c0_10, %c0_11], %19 {strides = array<i32>} : memref<4x256xf32, #tpu.memory_space<vmem>>, vector<4x256xf32>,
    } else {
    }
    %c0_i32_3 = arith.constant 0 : i32
    %7 = arith.cmpi eq, %arg1, %c0_i32_3 : i32
    %8 = arith.extui %7 : i1 to i32
    %c0_i32_4 = arith.constant 0 : i32
    %9 = arith.cmpi ne, %8, %c0_i32_4 : i32
    scf.if %9 {
      %c0 = arith.constant 0 : index
      %c0_8 = arith.constant 0 : index
      %c0_9 = arith.constant 0 : index
      %17 = vector.load %arg4[%c0, %c0_8, %c0_9] : memref<1x4x256xf32, #tpu.memory_space<vmem>>, vector<1x4x256xf32>
      %18 = vector.shape_cast %17 : vector<1x4x256xf32> to vector<4x256xf32>
      %c0_10 = arith.constant 0 : index
      %c0_11 = arith.constant 0 : index
      %19 = vector.load %arg8[%c0_10, %c0_11] : memref<4x256xf32, #tpu.memory_space<vmem>>, vector<4x256xf32>
      %20 = arith.addf %19, %18 : vector<4x256xf32>
      %c0_12 = arith.constant 0 : index
      %c0_13 = arith.constant 0 : index
      %21 = vector.load %arg8[%c0_12, %c0_13] : memref<4x256xf32, #tpu.memory_space<vmem>>, vector<4x256xf32>
      tpu.vector_store %arg8[%c0_12, %c0_13], %20 {strides = array<i32>} : memref<4x256xf32, #tpu.memory_space<vmem>>, vector<4x256xf32>,
      %c0_14 = arith.constant 0 : index
      %c0_15 = arith.constant 0 : index
      %22 = vector.load %arg9[%c0_14, %c0_15] : memref<4x256xf32, #tpu.memory_space<vmem>>, vector<4x256xf32>
      %23 = arith.mulf %18, %18 : vector<4x256xf32>
      %24 = arith.addf %22, %23 : vector<4x256xf32>
      %c0_16 = arith.constant 0 : index
      %c0_17 = arith.constant 0 : index
      %25 = vector.load %arg9[%c0_16, %c0_17] : memref<4x256xf32, #tpu.memory_space<vmem>>, vector<4x256xf32>
      tpu.vector_store %arg9[%c0_16, %c0_17], %24 {strides = array<i32>} : memref<4x256xf32, #tpu.memory_space<vmem>>, vector<4x256xf32>,
    } else {
    }
    %c1_i32 = arith.constant 1 : i32
    %10 = arith.cmpi eq, %arg1, %c1_i32 : i32
    %11 = arith.andi %10, %2 : i1
    %12 = arith.extui %11 : i1 to i32
    %c0_i32_5 = arith.constant 0 : i32
    %13 = arith.cmpi ne, %12, %c0_i32_5 : i32
    scf.if %13 {
      %c0 = arith.constant 0 : index
      %c0_8 = arith.constant 0 : index
      %17 = vector.load %arg8[%c0, %c0_8] : memref<4x256xf32, #tpu.memory_space<vmem>>, vector<4x256xf32>
      %cst = arith.constant dense<0.000000e+00> : vector<4xf32>
      %18 = vector.multi_reduction <add>, %17, %cst [1] : vector<4x256xf32> to vector<4xf32>
      %19 = vector.shape_cast %18 : vector<4xf32> to vector<4x1xf32>
      %cst_9 = arith.constant 0.001953125 : f32
      %20 = vector.broadcast %cst_9 : f32 to vector<4x1xf32>
      %21 = arith.mulf %19, %20 : vector<4x1xf32>
      %c0_10 = arith.constant 0 : index
      %c0_11 = arith.constant 0 : index
      %22 = vector.load %arg9[%c0_10, %c0_11] : memref<4x256xf32, #tpu.memory_space<vmem>>, vector<4x256xf32>
      %cst_12 = arith.constant dense<0.000000e+00> : vector<4xf32>
      %23 = vector.multi_reduction <add>, %22, %cst_12 [1] : vector<4x256xf32> to vector<4xf32>
      %24 = vector.shape_cast %23 : vector<4xf32> to vector<4x1xf32>
      %cst_13 = arith.constant 0.001953125 : f32
      %25 = vector.broadcast %cst_13 : f32 to vector<4x1xf32>
      %26 = arith.mulf %24, %25 : vector<4x1xf32>
      %27 = arith.mulf %21, %21 : vector<4x1xf32>
      %28 = arith.subf %26, %27 : vector<4x1xf32>
      %cst_14 = arith.constant 0.000000e+00 : f32
      %29 = vector.broadcast %cst_14 : f32 to vector<4x1xf32>
      %30 = arith.maximumf %28, %29 : vector<4x1xf32>
      %cst_15 = arith.constant 9.99999974E-6 : f32
      %31 = vector.broadcast %cst_15 : f32 to vector<4x1xf32>
      %32 = arith.addf %30, %31 : vector<4x1xf32>
      %33 = math.rsqrt %32 : vector<4x1xf32>
      %c0_16 = arith.constant 0 : index
      %c0_17 = arith.constant 0 : index
      %34 = vector.load %arg5[%c0_16, %c0_17] : memref<4x1xf32, #tpu.memory_space<vmem>>, vector<4x1xf32>
      %c0_18 = arith.constant 0 : index
      %c0_19 = arith.constant 0 : index
      %35 = vector.load %arg6[%c0_18, %c0_19] : memref<4x1xf32, #tpu.memory_space<vmem>>, vector<4x1xf32>
      %36 = arith.mulf %34, %33 : vector<4x1xf32>
      %37 = arith.mulf %21, %36 : vector<4x1xf32>
      %38 = arith.subf %35, %37 : vector<4x1xf32>
      %39 = vector.shape_cast %36 : vector<4x1xf32> to vector<4x1xf32>
      %40 = vector.broadcast %39 : vector<4x1xf32> to vector<4x256xf32>
      %c0_20 = arith.constant 0 : index
      %c0_21 = arith.constant 0 : index
      %41 = vector.load %arg10[%c0_20, %c0_21] : memref<4x256xf32, #tpu.memory_space<vmem>>, vector<4x256xf32>
      tpu.vector_store %arg10[%c0_20, %c0_21], %40 {strides = array<i32>} : memref<4x256xf32, #tpu.memory_space<vmem>>, vector<4x256xf32>,
      %42 = vector.shape_cast %38 : vector<4x1xf32> to vector<4x1xf32>
      %43 = vector.broadcast %42 : vector<4x1xf32> to vector<4x256xf32>
      %c0_22 = arith.constant 0 : index
      %c0_23 = arith.constant 0 : index
      %44 = vector.load %arg11[%c0_22, %c0_23] : memref<4x256xf32, #tpu.memory_space<vmem>>, vector<4x256xf32>
      tpu.vector_store %arg11[%c0_22, %c0_23], %43 {strides = array<i32>} : memref<4x256xf32, #tpu.memory_space<vmem>>, vector<4x256xf32>,
    } else {
    }
    %c1_i32_6 = arith.constant 1 : i32
    %14 = arith.cmpi eq, %arg1, %c1_i32_6 : i32
    %15 = arith.extui %14 : i1 to i32
    %c0_i32_7 = arith.constant 0 : i32
    %16 = arith.cmpi ne, %15, %c0_i32_7 : i32
    scf.if %16 {
      %c0 = arith.constant 0 : index
      %c0_8 = arith.constant 0 : index
      %c0_9 = arith.constant 0 : index
      %17 = vector.load %arg4[%c0, %c0_8, %c0_9] : memref<1x4x256xf32, #tpu.memory_space<vmem>>, vector<1x4x256xf32>
      %18 = vector.shape_cast %17 : vector<1x4x256xf32> to vector<4x256xf32>
      %c0_10 = arith.constant 0 : index
      %c0_11 = arith.constant 0 : index
      %19 = vector.load %arg10[%c0_10, %c0_11] : memref<4x256xf32, #tpu.memory_space<vmem>>, vector<4x256xf32>
      %20 = arith.mulf %18, %19 : vector<4x256xf32>
      %c0_12 = arith.constant 0 : index
      %c0_13 = arith.constant 0 : index
      %21 = vector.load %arg11[%c0_12, %c0_13] : memref<4x256xf32, #tpu.memory_space<vmem>>, vector<4x256xf32>
      %22 = arith.addf %20, %21 : vector<4x256xf32>
      %c0_14 = arith.constant 0 : index
      %c0_15 = arith.constant 0 : index
      %c0_16 = arith.constant 0 : index
      %23 = vector.load %arg7[%c0_14, %c0_15, %c0_16] : memref<1x4x256xf32, #tpu.memory_space<vmem>>, vector<1x4x256xf32>
      %24 = vector.shape_cast %23 : vector<1x4x256xf32> to vector<4x256xf32>
      %25 = vector.shape_cast %22 : vector<4x256xf32> to vector<1x4x256xf32>
      tpu.vector_store %arg7[%c0_14, %c0_15, %c0_16], %25 {strides = array<i32>} : memref<1x4x256xf32, #tpu.memory_space<vmem>>, vector<1x4x256xf32>,
    } else {
    }
    return
  }
  func.func @transform_0(%arg0: i32, %arg1: i32, %arg2: i32, %arg3: i32) -> (i32, i32, i32) {
    %c0_i32 = arith.constant 0 : i32
    return %arg2, %arg0, %arg3 : i32, i32, i32
  }
  func.func @transform_1(%arg0: i32, %arg1: i32, %arg2: i32, %arg3: i32) -> (i32, i32) {
    %c0_i32 = arith.constant 0 : i32
    %c0_i32_0 = arith.constant 0 : i32
    return %arg0, %c0_i32 : i32, i32
  }
  func.func @transform_2(%arg0: i32, %arg1: i32, %arg2: i32, %arg3: i32) -> (i32, i32) {
    %c0_i32 = arith.constant 0 : i32
    %c0_i32_0 = arith.constant 0 : i32
    return %arg0, %c0_i32 : i32, i32
  }
  func.func @transform_3(%arg0: i32, %arg1: i32, %arg2: i32, %arg3: i32) -> (i32, i32, i32) {
    %0 = arith.muli %arg2, %arg1 : i32
    %1 = arith.muli %arg3, %arg1 : i32
    %c0_i32 = arith.constant 0 : i32
    return %0, %arg0, %1 : i32, i32, i32
  }
}

</mosaic_0001>

<llo_original>
// kernel: tpu_custom_call.1
$region0: #{tpu_custom_call.1}
  #allocation0 [shape = 'u32[]', space=smem, size = 0x4, offset = 0x4, fixed_abs, tag = 'smem constant byte address 0x4 - core index']
  #allocation1 [shape = 'u32[144,128]{1,0:T(1,128)}', space=vmem, size = 0x12000, scoped, tag = 'internal scratch']
  #allocation2 [shape = 'f32[4,256]{1,0:T(4,128)}', space=vmem, size = 0x1000, scoped, tag = 'scratch operand']
  #allocation3 [shape = 'f32[4,256]{1,0:T(4,128)}', space=vmem, size = 0x1000, scoped, tag = 'scratch operand']
  #allocation4 [shape = 'f32[4,256]{1,0:T(4,128)}', space=vmem, size = 0x1000, scoped, tag = 'scratch operand']
  #allocation5 [shape = 'f32[4,256]{1,0:T(4,128)}', space=vmem, size = 0x1000, scoped, tag = 'scratch operand']
  %s0 = inlined_call_operand.hbm [shape: f32[2,4,256], index: 0, kind: input, shape index: {}]
  %s1 = inlined_call_operand.vmem [shape: f32[4,1], index: 1, kind: input, shape index: {}]
  %s2 = inlined_call_operand.vmem [shape: f32[4,1], index: 2, kind: input, shape index: {}]
  %s3 = inlined_call_operand.hbm [shape: f32[2,4,256], index: 3, kind: output, shape index: {}]
  %s4 = sld [smem:[#allocation0]]
  $region65: #{tpu_custom_call.1} parent=0
    _
  %s6 = ssub.s32 1, %s4
  %s7 = scalar_select 0, %s6, %s4
  $region1: #{tpu_custom_call.1} parent=0
    #allocation6 [shape = 'u8[8192]{0}', space=vmem, size = 0x2000, scoped, tag = 'input window, operand 0']
    #allocation7 [shape = 's32[2]{0}', space=sflag, size = 0x8, scoped, tag = 'scoped memory for tpu_custom_call.1']
    #allocation8 [shape = 's32[2]{0}', space=sflag, size = 0x8, scoped, tag = 'scoped memory for tpu_custom_call.1']
    #allocation9 [shape = 'u8[8192]{0}', space=vmem, size = 0x2000, scoped, tag = 'output window, operand 0']
    %8 = vsyncpa [#allocation7], 0
    %s9 = scalar_lea.sflag [#allocation7], 1
    %10 = vsyncpa %s9, 0
    %11 = vsyncpa [#allocation8], 0
    %s12 = scalar_lea.sflag [#allocation8], 1
    %13 = vsyncpa %s12, 0
    loop: start=0, step=1, limit=6
    $region2: #{tpu_custom_call.1} parent=1 // loop_pre_header
      _
    $region3: #{tpu_custom_call.1} parent=1 // loop_header
      %s15 = sphi 0, %s19
      %p16 = scmp.ge.s32.totalorder %s15, 6
      %s22 = sphi 0, %s48
      %s23 = sphi 0, %s44
      %s24 = sphi 0, %s40
      %s25 = sphi 0, %s36
      %s26 = sphi 0, %s22
      %s27 = sphi 0, %s23
      %s28 = sphi 0, %s24
      %s29 = sphi 0, %s25
      %s30 = sphi 0, %s26
      %s31 = sphi 0, %s27
      %s32 = sphi 0, %s28
      %s33 = sphi 0, %s29
      %s55 = sphi 0, %s57
      %s58 = sphi 0, %s55
      %s59 = sphi 0, %s58
      %s75 = sphi 0, %s59
      %s81 = sphi 0, %s83
      %s84 = sphi 0, %s81
      %s85 = sphi 0, %s84
      %s101 = sphi 0, %s85
      %s107 = sphi 0, %s109
      %s110 = sphi 0, %s107
      %s111 = sphi 0, %s110
      %s127 = sphi 0, %s111
      %s141 = sphi 0, %s143
      %s144 = sphi 0, %s141
      %s145 = sphi 0, %s144
      %s161 = sphi 0, %s145
    $region4: #{tpu_custom_call.1} parent=1 // loop_header_branch
      %18 = sbr.rel (%p16) target = $region8
    $region5: #{tpu_custom_call.1} parent=1 // loop_body
      %s20 = ssub.s32 %s15, 1
      %s21 = ssub.s32 %s15, 2
      %s34 = sadd.s32 1, %s25
      %p35 = scmp.ge.s32.totalorder %s34, 1
      %s36 = scalar_select %p35, 0, %s34
      %s37 = sadd.s32 1, %s24
      %s38 = scalar_select %p35, %s37, %s24
      %p39 = scmp.ge.s32.totalorder %s38, 2
      %s40 = scalar_select %p39, 0, %s38
      %s41 = sadd.s32 1, %s23
      %s42 = scalar_select %p39, %s41, %s23
      %p43 = scmp.ge.s32.totalorder %s42, 2
      %s44 = scalar_select %p43, 0, %s42
      %s45 = sadd.s32 1, %s22
      %s46 = scalar_select %p43, %s45, %s22
      %p47 = scmp.ge.s32.totalorder %s46, 1
      %s48 = scalar_select %p47, 0, %s46
      %s49 = ssub.s32 %s24, %s40
      %s50 = ssub.s32 %s22, %s48
      %s51 = sor.u32 %s49, %s50
      %s52 = ssub.s32 %s25, %s36
      %s53 = sor.u32 %s51, %s52
      %p54 = scmp.eq.s32.totalorder %s53, 0
      %s56 = sadd.s32 %s55, 1
      %s57 = scalar_select %p54, %s55, %s56
      %p60 = pneg %p54
      %p61 = scmp.eq.s32.totalorder %s15, 3
      %p62 = por %p60, %p61
      %p63 = scmp.ne.s32.totalorder %s55, %s58
      %p64 = scmp.eq.s32.totalorder %s15, 0
      %p65 = por %p63, %p64
      %p66 = scmp.ne.s32.totalorder %s55, %s58
      %p67 = scmp.eq.s32.totalorder %s20, 3
      %p68 = por %p66, %p67
      %p69 = scmp.ne.s32.totalorder %s58, %s59
      %p70 = scmp.eq.s32.totalorder %s20, 0
      %p71 = por %p69, %p70
      %p72 = scmp.ne.s32.totalorder %s58, %s59
      %p73 = scmp.eq.s32.totalorder %s21, 3
      %p74 = por %p72, %p73
      %p76 = scmp.ne.s32.totalorder %s59, %s75
      %p77 = scmp.eq.s32.totalorder %s21, 0
      %p78 = por %p76, %p77
      %s79 = ssub.s32 %s22, %s48
      %p80 = scmp.eq.s32.totalorder %s79, 0
      %s82 = sadd.s32 %s81, 1
      %s83 = scalar_select %p80, %s81, %s82
      %p86 = pneg %p80
      %p87 = scmp.eq.s32.totalorder %s15, 3
      %p88 = por %p86, %p87
      %p89 = scmp.ne.s32.totalorder %s81, %s84
      %p90 = scmp.eq.s32.totalorder %s15, 0
      %p91 = por %p89, %p90
      %p92 = scmp.ne.s32.totalorder %s81, %s84
      %p93 = scmp.eq.s32.totalorder %s20, 3
      %p94 = por %p92, %p93
      %p95 = scmp.ne.s32.totalorder %s84, %s85
      %p96 = scmp.eq.s32.totalorder %s20, 0
      %p97 = por %p95, %p96
      %p98 = scmp.ne.s32.totalorder %s84, %s85
      %p99 = scmp.eq.s32.totalorder %s21, 3
      %p100 = por %p98, %p99
      %p102 = scmp.ne.s32.totalorder %s85, %s101
      %p103 = scmp.eq.s32.totalorder %s21, 0
      %p104 = por %p102, %p103
      %s105 = ssub.s32 %s22, %s48
      %p106 = scmp.eq.s32.totalorder %s105, 0
      %s108 = sadd.s32 %s107, 1
      %s109 = scalar_select %p106, %s107, %s108
      %p112 = pneg %p106
      %p113 = scmp.eq.s32.totalorder %s15, 3
      %p114 = por %p112, %p113
      %p115 = scmp.ne.s32.totalorder %s107, %s110
      %p116 = scmp.eq.s32.totalorder %s15, 0
      %p117 = por %p115, %p116
      %p118 = scmp.ne.s32.totalorder %s107, %s110
      %p119 = scmp.eq.s32.totalorder %s20, 3
      %p120 = por %p118, %p119
      %p121 = scmp.ne.s32.totalorder %s110, %s111
      %p122 = scmp.eq.s32.totalorder %s20, 0
      %p123 = por %p121, %p122
      %p124 = scmp.ne.s32.totalorder %s110, %s111
      %p125 = scmp.eq.s32.totalorder %s21, 3
      %p126 = por %p124, %p125
      %p128 = scmp.ne.s32.totalorder %s111, %s127
      %p129 = scmp.eq.s32.totalorder %s21, 0
      %p130 = por %p128, %p129
      %s131 = smul.u32 %s24, %s23
      %s132 = smul.u32 %s25, %s23
      %s133 = smul.u32 %s40, %s44
      %s134 = smul.u32 %s36, %s44
      %s135 = ssub.s32 %s131, %s133
      %s136 = ssub.s32 %s22, %s48
      %s137 = sor.u32 %s135, %s136
      %s138 = ssub.s32 %s132, %s134
      %s139 = sor.u32 %s137, %s138
      %p140 = scmp.eq.s32.totalorder %s139, 0
      %s142 = sadd.s32 %s141, 1
      %s143 = scalar_select %p140, %s141, %s142
      %p146 = pneg %p140
      %p147 = scmp.eq.s32.totalorder %s15, 3
      %p148 = por %p146, %p147
      %p149 = scmp.ne.s32.totalorder %s141, %s144
      %p150 = scmp.eq.s32.totalorder %s15, 0
      %p151 = por %p149, %p150
      %p152 = scmp.ne.s32.totalorder %s141, %s144
      %p153 = scmp.eq.s32.totalorder %s20, 3
      %p154 = por %p152, %p153
      %p155 = scmp.ne.s32.totalorder %s144, %s145
      %p156 = scmp.eq.s32.totalorder %s20, 0
      %p157 = por %p155, %p156
      %p158 = scmp.ne.s32.totalorder %s144, %s145
      %p159 = scmp.eq.s32.totalorder %s21, 3
      %p160 = por %p158, %p159
      %p162 = scmp.ne.s32.totalorder %s145, %s161
      %p163 = scmp.eq.s32.totalorder %s21, 0
      %p164 = por %p162, %p163
      %p165 = scmp.le.s32.totalorder 1, %s15
      %p166 = scmp.lt.s32.totalorder %s15, 5
      %p167 = pnand %p165, %p166
      %p168 = pneg %p167
      // Predicated region
      $region9: #{tpu_custom_call.1} parent=5 // pred_check
        _
      $region10: #{tpu_custom_call.1} parent=5 // pred_check_branch
        %170 = sbr.rel (%p167) target = $region12
      $region11: #{tpu_custom_call.1} parent=5 // pred_region
        %s171 = ssub.s32 %s15, 1
        // Predicated region
        $region13: #{tpu_custom_call.1} parent=11 // pred_check
          %p172 = pneg %p97
        $region14: #{tpu_custom_call.1} parent=11 // pred_check_branch
          %174 = sbr.rel (%p172) target = $region16
        $region15: #{tpu_custom_call.1} parent=11 // pred_region
          %p175 = scmp.lt.s32.totalorder %s26, 0
          %s176 = scalar_select %p175, %s26, 0
          %s177 = smul.addr %s176, 4
          %s178 = scalar_lea.vmem %s1, %s177
        $region16: #{tpu_custom_call.1} parent=11 // pred_fallthru
          _
        // Predicated region
        $region17: #{tpu_custom_call.1} parent=11 // pred_check
          %p179 = pneg %p123
        $region18: #{tpu_custom_call.1} parent=11 // pred_check_branch
          %181 = sbr.rel (%p179) target = $region20
        $region19: #{tpu_custom_call.1} parent=11 // pred_region
          %p182 = scmp.lt.s32.totalorder %s26, 0
          %s183 = scalar_select %p182, %s26, 0
          %s184 = smul.addr %s183, 4
          %s185 = scalar_lea.vmem %s2, %s184
        $region20: #{tpu_custom_call.1} parent=11 // pred_fallthru
          _
      $region12: #{tpu_custom_call.1} parent=5 // pred_fallthru
        _
      %p186 = scmp.lt.s32.totalorder %s15, 4
      // Predicated region
      $region21: #{tpu_custom_call.1} parent=5 // pred_check
        %p187 = pneg %p186
      $region22: #{tpu_custom_call.1} parent=5 // pred_check_branch
        %189 = sbr.rel (%p187) target = $region24
      $region23: #{tpu_custom_call.1} parent=5 // pred_region
        // Predicated region
        $region25: #{tpu_custom_call.1} parent=23 // pred_check
          %p190 = pneg %p65
        $region26: #{tpu_custom_call.1} parent=23 // pred_check_branch
          %192 = sbr.rel (%p190) target = $region28
        $region27: #{tpu_custom_call.1} parent=23 // pred_region
          %s193 = sand.u32 %s55, 1
          %s194 = scalar_lea.sflag [#allocation7], %s193
          %s195 = sand.u32 %s55, 1
          %s196 = smul.addr %s195, 8
          %s197 = scalar_lea.vmem [#allocation6], %s196
          %s198 = smul.u32 2, %s25
          %s200 = ssub.s32 128, 128
          %201 = vsyncadd %s194, %s200
          %s202 = smul.addr %s22, 2
          %s203 = sadd.s32 %s198, %s202
          %s204 = smul.addr %s24, 2
          %s205 = sadd.s32 %s203, %s204
          %s206 = smul.addr %s205, 64
          %s207 = scalar_lea.hbm %s0, %s206
          %s209 = sshll.u32 %s197, 4
          %s210 = int_to_ptr.vmem [resolvable:$true] %s209
          %212 = dma.hbm_to_vmem [thread:$0]  %s207, 128, %s210, %s194
        $region28: #{tpu_custom_call.1} parent=23 // pred_fallthru
          _
      $region24: #{tpu_custom_call.1} parent=5 // pred_fallthru
        _
      %p213 = scmp.le.s32.totalorder 1, %s15
      %p214 = scmp.lt.s32.totalorder %s15, 5
      %p215 = pnand %p213, %p214
      %p216 = pneg %p215
      // Predicated region
      $region29: #{tpu_custom_call.1} parent=5 // pred_check
        _
      $region30: #{tpu_custom_call.1} parent=5 // pred_check_branch
        %218 = sbr.rel (%p215) target = $region32
      $region31: #{tpu_custom_call.1} parent=5 // pred_region
        %s219 = ssub.s32 %s15, 1
        %s220 = sand.u32 %s58, 1
        %s221 = scalar_lea.sflag [#allocation7], %s220
        %s222 = sand.u32 %s58, 1
        %s223 = smul.addr %s222, 8
        %s224 = scalar_lea.vmem [#allocation6], %s223
        // Predicated region
        $region33: #{tpu_custom_call.1} parent=31 // pred_check
          %p225 = pneg %p71
        $region34: #{tpu_custom_call.1} parent=31 // pred_check_branch
          %227 = sbr.rel (%p225) target = $region36
        $region35: #{tpu_custom_call.1} parent=31 // pred_region
          %228 = dma.done %s221, 128
        $region36: #{tpu_custom_call.1} parent=31 // pred_fallthru
          _
        %s229 = sand.u32 %s58, 1
        %s230 = scalar_lea.sflag [#allocation7], %s229
        %s231 = sand.u32 %s58, 1
        %s232 = smul.addr %s231, 8
        %s233 = scalar_lea.vmem [#allocation6], %s232
        %p234 = pneg %p71
        %p235 = pneg %p68
        %p236 = scmp.lt.s32.totalorder %s26, 0
        %s237 = scalar_select %p236, %s26, 0
        %s238 = smul.addr %s237, 4
        %s239 = scalar_lea.vmem %s1, %s238
        %p240 = pneg %p97
        %p241 = pneg %p94
        %p242 = scmp.lt.s32.totalorder %s26, 0
        %s243 = scalar_select %p242, %s26, 0
        %s244 = smul.addr %s243, 4
        %s245 = scalar_lea.vmem %s2, %s244
        %p246 = pneg %p123
        %p247 = pneg %p120
        %p248 = pneg %p157
        %p249 = pneg %p154
        %s250 = sand.u32 %s144, 1
        %s251 = scalar_lea.sflag [#allocation8], %s250
        %s252 = sand.u32 %s144, 1
        %s253 = smul.addr %s252, 8
        %s254 = scalar_lea.vmem [#allocation9], %s253
        %s255 = smul.u32 2, %s29
        %p256 = scmp.lt.s32.totalorder %s26, 0
        %s257 = scalar_select %p256, %s26, 0
        %s258 = smul.addr %s257, 4
        %s259 = scalar_lea.vmem %s1, %s258
        %p260 = scmp.lt.s32.totalorder %s26, 0
        %s261 = scalar_select %p260, %s26, 0
        %s262 = smul.addr %s261, 4
        %s263 = scalar_lea.vmem %s2, %s262
        %s264 = smul.u32 %s28, %s27
        %s265 = smul.u32 %s29, %s27
        %s266 = smul.u32 2, %s265
        %p267 = scmp.eq.s32.totalorder %s28, 0
        %p268 = scmp.eq.s32.totalorder %s29, 0
        %p269 = pnand %p267, %p268
        %p270 = pneg %p269
        %p271 = scmp.eq.s32.totalorder %s27, 0
        %p272 = pnand %p271, %p270
        %p273 = pneg %p272
        // Predicated region
        $region37: #{tpu_custom_call.1} parent=31 // pred_check
          _
        $region38: #{tpu_custom_call.1} parent=31 // pred_check_branch
          %275 = sbr.rel (%p272) target = $region40
        $region39: #{tpu_custom_call.1} parent=31 // pred_region
          %276 = vst [vmem:[#allocation2] sm:$0xff] 0.0
          %277 = vst [vmem:[#allocation3] sm:$0xff] 0.0
        $region40: #{tpu_custom_call.1} parent=31 // pred_fallthru
          _
        // Predicated region
        $region41: #{tpu_custom_call.1} parent=31 // pred_check
          %p278 = pneg %p271
        $region42: #{tpu_custom_call.1} parent=31 // pred_check_branch
          %280 = sbr.rel (%p278) target = $region44
        $region43: #{tpu_custom_call.1} parent=31 // pred_region
          %v281 = vld [vmem:[%s224] sm:$0xff]
          %v282 = vld [vmem:[#allocation2] sm:$0xff]
          %v283 = vadd.f32 %v282, %v281
          %284 = vst [vmem:[#allocation2] sm:$0xff] %v283
          %v285 = vld [vmem:[#allocation3] sm:$0xff]
          %v286 = vmul.f32 %v281, %v281
          %v287 = vadd.f32 %v285, %v286
          %288 = vst [vmem:[#allocation3] sm:$0xff] %v287
        $region44: #{tpu_custom_call.1} parent=31 // pred_fallthru
          _
        %p289 = scmp.eq.s32.totalorder %s27, 1
        %p290 = pnand %p289, %p270
        %p291 = pneg %p290
        // Predicated region
        $region45: #{tpu_custom_call.1} parent=31 // pred_check
          _
        $region46: #{tpu_custom_call.1} parent=31 // pred_check_branch
          %293 = sbr.rel (%p290) target = $region48
        $region47: #{tpu_custom_call.1} parent=31 // pred_region
          %v294 = vld [vmem:[#allocation2] sm:$0xff]
          %v296 = vcombine.high %v294, %v294
          %vm298 = vcmask 1043456
          %v299 = vsel %vm298, %v294, 0.0
          %v300 = vsel %vm298, %v296, 0.0
          %v301 = vadd.f32 %v299, %v300
          %302 = vadd.xlane.f32.xlu0 %v301
          %v303 = vpop.xlane.xlu0 %302
          %v304 = vmul.f32 %v303, 0.001953125
          %v305 = vld [vmem:[#allocation3] sm:$0xff]
          %v307 = vcombine.high %v305, %v305
          %v309 = vsel %vm298, %v305, 0.0
          %v310 = vsel %vm298, %v307, 0.0
          %v311 = vadd.f32 %v309, %v310
          %312 = vadd.xlane.f32.xlu0 %v311
          %v313 = vpop.xlane.xlu0 %312
          %v314 = vmul.f32 %v313, 0.001953125
          %v315 = vmul.f32 %v304, %v304
          %v316 = vsub.f32 %v314, %v315
          %v317 = vmax.f32 %v316, 0.0
          %v318 = vadd.f32 %v317, 1e-05
          %v319 = vrsqrt.pop %v318
          %v320 = vld [vmem:[%s259] sm:$0xf]
          %v321 = vld [vmem:[%s263] sm:$0xf]
          %v322 = vmul.f32 %v320, %v319
          %v323 = vmul.f32 %v304, %v322
          %v324 = vsub.f32 %v321, %v323
          %326 = vset.pattern.permute.xlu0 0
          %327 = vperm.xlu0 %326, %v322
          %v328 = vpop.permute.xlu0 %327
          %v330 = vunpack.c.l.s4 839922192
          %v331 = vunpack.c.0.s8 %v330
          %v332 = vlaneseq
          %v333 = vshrl.u32 %v332, 7
          %v334 = vsub.s32 %v331, %v333
          %v335 = vrot.slane %v328, %v334
          %337 = vst [vmem:[#allocation4] sm:$0xff] %v335
          %339 = vset.pattern.permute.xlu0 0
          %340 = vperm.xlu0 %339, %v324
          %v341 = vpop.permute.xlu0 %340
          %v343 = vunpack.c.l.s4 839922192
          %v344 = vunpack.c.0.s8 %v343
          %v345 = vlaneseq
          %v346 = vshrl.u32 %v345, 7
          %v347 = vsub.s32 %v344, %v346
          %v348 = vrot.slane %v341, %v347
          %350 = vst [vmem:[#allocation5] sm:$0xff] %v348
        $region48: #{tpu_custom_call.1} parent=31 // pred_fallthru
          _
        // Predicated region
        $region49: #{tpu_custom_call.1} parent=31 // pred_check
          %p351 = pneg %p289
        $region50: #{tpu_custom_call.1} parent=31 // pred_check_branch
          %353 = sbr.rel (%p351) target = $region52
        $region51: #{tpu_custom_call.1} parent=31 // pred_region
          %v354 = vld [vmem:[%s224] sm:$0xff]
          %v355 = vld [vmem:[#allocation4] sm:$0xff]
          %v356 = vmul.f32 %v354, %v355
          %v357 = vld [vmem:[#allocation5] sm:$0xff]
          %v358 = vadd.f32 %v356, %v357
          %359 = vst [vmem:[%s254] sm:$0xff] %v358
        $region52: #{tpu_custom_call.1} parent=31 // pred_fallthru
          _
        %s360 = sand.u32 %s144, 1
        %s361 = scalar_lea.sflag [#allocation8], %s360
        %s362 = sand.u32 %s144, 1
        %s363 = smul.addr %s362, 8
        %s364 = scalar_lea.vmem [#allocation9], %s363
        // Predicated region
        $region53: #{tpu_custom_call.1} parent=31 // pred_check
          %p365 = pneg %p154
        $region54: #{tpu_custom_call.1} parent=31 // pred_check_branch
          %367 = sbr.rel (%p365) target = $region56
        $region55: #{tpu_custom_call.1} parent=31 // pred_region
          %s368 = smul.u32 %s28, %s27
          %s369 = smul.u32 %s29, %s27
          %s370 = smul.u32 2, %s369
          %s372 = ssub.s32 128, 128
          %373 = vsyncadd %s361, %s372
          %s374 = smul.addr %s26, 2
          %s375 = sadd.s32 %s370, %s374
          %s376 = smul.addr %s368, 2
          %s377 = sadd.s32 %s375, %s376
          %s378 = smul.addr %s377, 64
          %s379 = scalar_lea.hbm %s3, %s378
          %s381 = sshll.u32 %s364, 4
          %s382 = int_to_ptr.vmem [resolvable:$true] %s381
          %384 = dma.vmem_to_hbm [thread:$0]  %s382, 128, %s379, %s361
        $region56: #{tpu_custom_call.1} parent=31 // pred_fallthru
          _
      $region32: #{tpu_custom_call.1} parent=5 // pred_fallthru
        _
      %p385 = scmp.le.s32.totalorder 2, %s15
      // Predicated region
      $region57: #{tpu_custom_call.1} parent=5 // pred_check
        %p386 = pneg %p385
      $region58: #{tpu_custom_call.1} parent=5 // pred_check_branch
        %388 = sbr.rel (%p386) target = $region60
      $region59: #{tpu_custom_call.1} parent=5 // pred_region
        %s389 = ssub.s32 %s15, 2
        // Predicated region
        $region61: #{tpu_custom_call.1} parent=59 // pred_check
          %p390 = pneg %p160
        $region62: #{tpu_custom_call.1} parent=59 // pred_check_branch
          %392 = sbr.rel (%p390) target = $region64
        $region63: #{tpu_custom_call.1} parent=59 // pred_region
          %s393 = sand.u32 %s145, 1
          %s394 = scalar_lea.sflag [#allocation8], %s393
          %s395 = sand.u32 %s145, 1
          %s396 = smul.addr %s395, 8
          %s397 = scalar_lea.vmem [#allocation9], %s396
          %398 = dma.done %s394, 128
        $region64: #{tpu_custom_call.1} parent=59 // pred_fallthru
          _
      $region60: #{tpu_custom_call.1} parent=5 // pred_fallthru
        _
    $region6: #{tpu_custom_call.1} parent=1 // loop_footer
      %s19 = sadd.s32 1, %s15
    $region7: #{tpu_custom_call.1} parent=1 // loop_footer_branch
      %14 = sbr.rel target = $region3
    $region8: #{tpu_custom_call.1} parent=1 // loop_exit
      _
    %399 = vsyncpa [#allocation7], 1
    %s400 = scalar_lea.sflag [#allocation7], 1
    %401 = vsyncpa %s400, 1
    %402 = vsyncpa [#allocation8], 1
    %s403 = scalar_lea.sflag [#allocation8], 1
    %404 = vsyncpa %s403, 1

</llo_original>
